<compile_context>
chip_gen: v7x
topology: tpu7x:2x2x1
jax: 0.10.0
libtpu: 0.0.40
codegen_flags: <defaults>
</compile_context>

<pallas_src>
import math

import jax
import jax.numpy as jnp
from jax.experimental import pallas as pl
from jax.experimental.pallas import tpu as pltpu

_GELU_C = math.sqrt(2.0 / math.pi)


def _round_up(x, m):
    return (x + m - 1) // m * m


def _mlp_kernel(x_ref, w1_ref, b1_ref, w2_ref, b2_ref, o_ref, acc_ref):
    """One (tm, C_in) token tile x one hidden chunk (grid axis 1 = reduction)."""
    k = pl.program_id(1)

    @pl.when(k == 0)
    def _():
        acc_ref[...] = jnp.zeros_like(acc_ref)

    # fc1 partial: (tm, C_in) @ (C_in, th) with f32 accumulation on the MXU.
    h = jnp.dot(x_ref[...], w1_ref[...], preferred_element_type=jnp.float32)
    h = h + b1_ref[...]  # bias kept in f32, added once per tile

    # tanh-approx GELU, exactly as the PyTorch GELU module:
    #   0.5 * h * (1 + tanh(sqrt(2/pi) * (h + 0.044715 * h^3)))
    # (h + 0.044715*h^3) rewritten as h*(1 + 0.044715*h^2) to trim VPU muls;
    # tanh goes to the EUP slot and hides under the MXU.
    h2 = h * h
    h = 0.5 * h * (1.0 + jnp.tanh(_GELU_C * (h * (1.0 + 0.044715 * h2))))

    # drop1: p = 0.0 -> identity
    # fc2 partial accumulate: (tm, th) @ (th, OUT) += f32 accumulator.
    acc_ref[...] += jnp.dot(h.astype(w2_ref.dtype), w2_ref[...],
                            preferred_element_type=jnp.float32)

    @pl.when(k == pl.num_programs(1) - 1)
    def _():
        # drop2: p = 0.0 -> identity
        o_ref[...] = (acc_ref[...] + b2_ref[...]).astype(o_ref.dtype)


def mlp_pallas(x, w1, b1, w2, b2, *, tm=256, th=4096,
               compute_dtype=None, single_buffer_weights=True):
    """x: (B, S, C_in); w1: (C_in, HID); b1: (HID,); w2: (HID, OUT); b2: (OUT,)."""
    orig_dtype = x.dtype
    B, S, C_in = x.shape
    HID = w1.shape[1]
    OUT = w2.shape[1]
    M = B * S

    cdt = jnp.dtype(compute_dtype) if compute_dtype is not None else jnp.dtype(orig_dtype)

    # --- tile sizes; pad instead of asserting divisibility ---
    tm_eff = min(tm, _round_up(M, 16))          # sublane-safe for f32 and bf16
    M_pad = _round_up(M, tm_eff)

    if HID <= th:
        th_eff, HID_pad = HID, HID              # weights fully resident
    else:
        th_eff = _round_up(th, 128)             # lane-aligned hidden chunks
        HID_pad = _round_up(HID, th_eff)
    nh = HID_pad // th_eff

    # --- pack / pad operands (zero-padded hidden columns contribute exactly 0) ---
    x2 = x.reshape(M, C_in).astype(cdt)
    if M_pad != M:
        x2 = jnp.pad(x2, ((0, M_pad - M), (0, 0)))
    w1c = w1.astype(cdt)
    w2c = w2.astype(cdt)
    b1f = b1.astype(jnp.float32)
    b2f = b2.astype(jnp.float32)
    if HID_pad != HID:
        pad_h = HID_pad - HID
        w1c = jnp.pad(w1c, ((0, 0), (0, pad_h)))
        b1f = jnp.pad(b1f, (0, pad_h))
        w2c = jnp.pad(w2c, ((0, pad_h), (0, 0)))
    b1_2 = b1f.reshape(1, HID_pad)
    b2_2 = b2f.reshape(1, OUT)

    grid = (M_pad // tm_eff, nh)

    # --- explicit VMEM budget instead of the default scoped limit ---
    cbytes = cdt.itemsize
    obytes = jnp.dtype(orig_dtype).itemsize
    wbuf = 1 if (single_buffer_weights and nh == 1) else 2
    est = (2 * tm_eff * C_in * cbytes                         # x, double-buffered
           + 2 * tm_eff * OUT * obytes                        # out, double-buffered
           + wbuf * (C_in * th_eff + th_eff * OUT) * cbytes   # weights
           + 2 * (th_eff + OUT) * 4                           # biases (f32)
           + tm_eff * OUT * 4                                 # accumulator scratch
           + 2 * tm_eff * th_eff * 4)                         # fc1/GELU intermediates
    vmem_limit = int(min(max(est * 3 // 2 + (2 << 20), 32 << 20), 64 << 20))

    # TODO(synk): for lane-dense stores, pad OUT to a multiple of 128 in real deployments.

    def _call(use_buffered):
        resident = pl.Buffered(1) if use_buffered else None

        def spec(shape, index_map, constant):
            if constant and resident is not None:
                return pl.BlockSpec(shape, index_map, pipeline_mode=resident)
            return pl.BlockSpec(shape, index_map)

        weights_const = nh == 1  # only grid-invariant blocks get single-buffered
        grid_spec = pltpu.PrefetchScalarGridSpec(
            num_scalar_prefetch=0,
            grid=grid,
            in_specs=[
                pl.BlockSpec((tm_eff, C_in), lambda i, k: (i, 0)),
                spec((C_in, th_eff), lambda i, k: (0, k), weights_const),
                spec((1, th_eff), lambda i, k: (0, k), weights_const),
                spec((th_eff, OUT), lambda i, k: (k, 0), weights_const),
                spec((1, OUT), lambda i, k: (0, 0), True),
            ],
            out_specs=pl.BlockSpec((tm_eff, OUT), lambda i, k: (i, 0)),
            scratch_shapes=[pltpu.VMEM((tm_eff, OUT), jnp.float32)],
        )
        return pl.pallas_call(
            _mlp_kernel,
            out_shape=jax.ShapeDtypeStruct((M_pad, OUT), orig_dtype),
            grid_spec=grid_spec,
            compiler_params=pltpu.CompilerParams(
                dimension_semantics=("parallel", "arbitrary"),
                vmem_limit_bytes=vmem_limit,
            ),
        )(x2, w1c, b1_2, w2c, b2_2)

    if single_buffer_weights:
        try:
            out2 = _call(True)
        except Exception:  # fallback if pipeline_mode/Buffered(1) is unsupported
            out2 = _call(False)
    else:
        out2 = _call(False)

    return out2[:M].reshape(B, S, OUT)


def mlp_reference(x, w1, b1, w2, b2):
    h = jnp.einsum("bsc,ch->bsh", x, w1) + b1
    h = 0.5 * h * (1.0 + jnp.tanh(_GELU_C * (h + 0.044715 * h ** 3)))
    return jnp.einsum("bsh,ho->bso", h, w2) + b2


if __name__ == "__main__":
    key = jax.random.PRNGKey(0)

    def make_params(k, cin, hid, cout):
        kw1, kb1, kw2, kb2 = jax.random.split(k, 4)
        bd1 = 1.0 / math.sqrt(cin)
        bd2 = 1.0 / math.sqrt(hid)
        w1 = jax.random.uniform(kw1, (cin, hid), minval=-bd1, maxval=bd1, dtype=jnp.float32)
        b1 = jax.random.uniform(kb1, (hid,), minval=-bd1, maxval=bd1, dtype=jnp.float32)
        w2 = jax.random.uniform(kw2, (hid, cout), minval=-bd2, maxval=bd2, dtype=jnp.float32)
        b2 = jax.random.uniform(kb2, (cout,), minval=-bd2, maxval=bd2, dtype=jnp.float32)
        return w1, b1, w2, b2

    # --- test 1: small ViT-like shapes, f32 compute path (tight check) ---
    kx, kp, key = jax.random.split(key, 3)
    B, S, C_in, HID, OUT = 2, 8, 32, 64, 32
    x = jax.random.normal(kx, (B, S, C_in), dtype=jnp.float32)
    w1, b1, w2, b2 = make_params(kp, C_in, HID, OUT)

    out = jax.block_until_ready(mlp_pallas(x, w1, b1, w2, b2))
    ref = mlp_reference(x, w1, b1, w2, b2)
    assert out.shape == (B, S, OUT)
    assert jnp.allclose(out, ref, atol=1e-5, rtol=1e-5), "f32 path mismatch"

    # --- test 2: bf16 compute path (MXU dtype), loose tolerance ---
    out_bf16 = jax.block_until_ready(
        mlp_pallas(x, w1, b1, w2, b2, compute_dtype=jnp.bfloat16))
    assert jnp.allclose(out_bf16, ref, atol=5e-2, rtol=5e-2), "bf16 path mismatch"

    # --- test 3: hidden-chunked reduction + ragged M (padding path) ---
    kx2, kp2, key = jax.random.split(key, 3)
    B2, S2, C2, H2, O2 = 2, 13, 64, 256, 128
    x2 = jax.random.normal(kx2, (B2, S2, C2), dtype=jnp.float32)
    p2 = make_params(kp2, C2, H2, O2)
    out2 = jax.block_until_ready(mlp_pallas(x2, *p2, th=128))
    ref2 = mlp_reference(x2, *p2)
    assert out2.shape == (B2, S2, O2)
    assert jnp.allclose(out2, ref2, atol=1e-5, rtol=1e-5), "chunked path mismatch"

    print("KERNEL_OK")
</pallas_src>

<mosaic_0001>
module attributes {stable_mosaic.version = 11 : i64} {
  func.func @_mlp_kernel(%arg0: i32, %arg1: i32, %arg2: memref<16x32xf32, #tpu.memory_space<vmem>>, %arg3: memref<32x64xf32, #tpu.memory_space<vmem>>, %arg4: memref<1x64xf32, #tpu.memory_space<vmem>>, %arg5: memref<64x32xf32, #tpu.memory_space<vmem>>, %arg6: memref<1x32xf32, #tpu.memory_space<vmem>>, %arg7: memref<16x32xf32, #tpu.memory_space<vmem>>, %arg8: memref<16x32xf32, #tpu.memory_space<vmem>>) attributes {dimension_semantics = [#tpu.dimension_semantics<parallel>, #tpu.dimension_semantics<arbitrary>], iteration_bounds = array<i64: 1, 1>, scalar_prefetch = 0 : i64, scratch_operands = 1 : i64, tpu.core_type = #tpu.core_type<tc>, window_params = [{transform_indices = @transform_0, window_bounds = array<i64: 16, 32>}, {pipeline_mode = #tpu.pipeline_mode<synchronous>, transform_indices = @transform_1, window_bounds = array<i64: 32, 64>}, {pipeline_mode = #tpu.pipeline_mode<synchronous>, transform_indices = @transform_2, window_bounds = array<i64: 1, 64>}, {pipeline_mode = #tpu.pipeline_mode<synchronous>, transform_indices = @transform_3, window_bounds = array<i64: 64, 32>}, {pipeline_mode = #tpu.pipeline_mode<synchronous>, transform_indices = @transform_4, window_bounds = array<i64: 1, 32>}, {transform_indices = @transform_5, window_bounds = array<i64: 16, 32>}]} {
    %c0_i32 = arith.constant 0 : i32
    %0 = arith.cmpi eq, %arg1, %c0_i32 : i32
    %1 = arith.extui %0 : i1 to i32
    %c0_i32_0 = arith.constant 0 : i32
    %2 = arith.cmpi ne, %1, %c0_i32_0 : i32
    scf.if %2 {
      %cst_20 = arith.constant 0.000000e+00 : f32
      %31 = vector.broadcast %cst_20 : f32 to vector<16x32xf32>
      %c0_21 = arith.constant 0 : index
      %c0_22 = arith.constant 0 : index
      %32 = vector.load %arg8[%c0_21, %c0_22] : memref<16x32xf32, #tpu.memory_space<vmem>>, vector<16x32xf32>
      tpu.vector_store %arg8[%c0_21, %c0_22], %31 {strides = array<i32>} : memref<16x32xf32, #tpu.memory_space<vmem>>, vector<16x32xf32>,
    } else {
    }
    %c0 = arith.constant 0 : index
    %c0_1 = arith.constant 0 : index
    %3 = vector.load %arg2[%c0, %c0_1] : memref<16x32xf32, #tpu.memory_space<vmem>>, vector<16x32xf32>
    %c0_2 = arith.constant 0 : index
    %c0_3 = arith.constant 0 : index
    %4 = vector.load %arg3[%c0_2, %c0_3] : memref<32x64xf32, #tpu.memory_space<vmem>>, vector<32x64xf32>
    %cst = arith.constant dense<0.000000e+00> : vector<16x64xf32>
    %5 = tpu.matmul %3, %4, %cst {dimension_numbers = #tpu.dot_dimension_numbers<[1], [0], [0], [1], [0, 0, 1, 1], [], []>} : vector<16x32xf32>, vector<32x64xf32>, vector<16x64xf32> -> vector<16x64xf32>
    %c0_4 = arith.constant 0 : index
    %c0_5 = arith.constant 0 : index
    %6 = vector.load %arg4[%c0_4, %c0_5] : memref<1x64xf32, #tpu.memory_space<vmem>>, vector<1x64xf32>
    %7 = vector.broadcast %6 : vector<1x64xf32> to vector<16x64xf32>
    %8 = arith.addf %5, %7 : vector<16x64xf32>
    %9 = arith.mulf %8, %8 : vector<16x64xf32>
    %cst_6 = arith.constant 5.000000e-01 : f32
    %10 = vector.broadcast %cst_6 : f32 to vector<16x64xf32>
    %11 = arith.mulf %10, %8 : vector<16x64xf32>
    %cst_7 = arith.constant 4.471500e-02 : f32
    %12 = vector.broadcast %cst_7 : f32 to vector<16x64xf32>
    %13 = arith.mulf %12, %9 : vector<16x64xf32>
    %cst_8 = arith.constant 1.000000e+00 : f32
    %14 = vector.broadcast %cst_8 : f32 to vector<16x64xf32>
    %15 = arith.addf %14, %13 : vector<16x64xf32>
    %16 = arith.mulf %8, %15 : vector<16x64xf32>
    %cst_9 = arith.constant 0.797884583 : f32
    %17 = vector.broadcast %cst_9 : f32 to vector<16x64xf32>
    %18 = arith.mulf %17, %16 : vector<16x64xf32>
    %19 = math.tanh %18 : vector<16x64xf32>
    %cst_10 = arith.constant 1.000000e+00 : f32
    %20 = vector.broadcast %cst_10 : f32 to vector<16x64xf32>
    %21 = arith.addf %20, %19 : vector<16x64xf32>
    %22 = arith.mulf %11, %21 : vector<16x64xf32>
    %c0_11 = arith.constant 0 : index
    %c0_12 = arith.constant 0 : index
    %23 = vector.load %arg8[%c0_11, %c0_12] : memref<16x32xf32, #tpu.memory_space<vmem>>, vector<16x32xf32>
    %c0_13 = arith.constant 0 : index
    %c0_14 = arith.constant 0 : index
    %24 = vector.load %arg5[%c0_13, %c0_14] : memref<64x32xf32, #tpu.memory_space<vmem>>, vector<64x32xf32>
    %cst_15 = arith.constant dense<0.000000e+00> : vector<16x32xf32>
    %25 = tpu.matmul %22, %24, %cst_15 {dimension_numbers = #tpu.dot_dimension_numbers<[1], [0], [0], [1], [0, 0, 1, 1], [], []>} : vector<16x64xf32>, vector<64x32xf32>, vector<16x32xf32> -> vector<16x32xf32>
    %26 = arith.addf %23, %25 : vector<16x32xf32>
    %c0_16 = arith.constant 0 : index
    %c0_17 = arith.constant 0 : index
    %27 = vector.load %arg8[%c0_16, %c0_17] : memref<16x32xf32, #tpu.memory_space<vmem>>, vector<16x32xf32>
    tpu.vector_store %arg8[%c0_16, %c0_17], %26 {strides = array<i32>} : memref<16x32xf32, #tpu.memory_space<vmem>>, vector<16x32xf32>,
    %c0_i32_18 = arith.constant 0 : i32
    %28 = arith.cmpi eq, %arg1, %c0_i32_18 : i32
    %29 = arith.extui %28 : i1 to i32
    %c0_i32_19 = arith.constant 0 : i32
    %30 = arith.cmpi ne, %29, %c0_i32_19 : i32
    scf.if %30 {
      %c0_20 = arith.constant 0 : index
      %c0_21 = arith.constant 0 : index
      %31 = vector.load %arg8[%c0_20, %c0_21] : memref<16x32xf32, #tpu.memory_space<vmem>>, vector<16x32xf32>
      %c0_22 = arith.constant 0 : index
      %c0_23 = arith.constant 0 : index
      %32 = vector.load %arg6[%c0_22, %c0_23] : memref<1x32xf32, #tpu.memory_space<vmem>>, vector<1x32xf32>
      %33 = vector.broadcast %32 : vector<1x32xf32> to vector<16x32xf32>
      %34 = arith.addf %31, %33 : vector<16x32xf32>
      %c0_24 = arith.constant 0 : index
      %c0_25 = arith.constant 0 : index
      %35 = vector.load %arg7[%c0_24, %c0_25] : memref<16x32xf32, #tpu.memory_space<vmem>>, vector<16x32xf32>
      tpu.vector_store %arg7[%c0_24, %c0_25], %34 {strides = array<i32>} : memref<16x32xf32, #tpu.memory_space<vmem>>, vector<16x32xf32>,
    } else {
    }
    return
  }
  func.func @transform_0(%arg0: i32, %arg1: i32) -> (i32, i32) {
    %c0_i32 = arith.constant 0 : i32
    %c0_i32_0 = arith.constant 0 : i32
    return %arg0, %c0_i32 : i32, i32
  }
  func.func @transform_1(%arg0: i32, %arg1: i32) -> (i32, i32) {
    %c0_i32 = arith.constant 0 : i32
    %c0_i32_0 = arith.constant 0 : i32
    return %c0_i32, %arg1 : i32, i32
  }
  func.func @transform_2(%arg0: i32, %arg1: i32) -> (i32, i32) {
    %c0_i32 = arith.constant 0 : i32
    %c0_i32_0 = arith.constant 0 : i32
    return %c0_i32, %arg1 : i32, i32
  }
  func.func @transform_3(%arg0: i32, %arg1: i32) -> (i32, i32) {
    %c0_i32 = arith.constant 0 : i32
    %c0_i32_0 = arith.constant 0 : i32
    return %arg1, %c0_i32 : i32, i32
  }
  func.func @transform_4(%arg0: i32, %arg1: i32) -> (i32, i32) {
    %c0_i32 = arith.constant 0 : i32
    %c0_i32_0 = arith.constant 0 : i32
    %c0_i32_1 = arith.constant 0 : i32
    return %c0_i32, %c0_i32_0 : i32, i32
  }
  func.func @transform_5(%arg0: i32, %arg1: i32) -> (i32, i32) {
    %c0_i32 = arith.constant 0 : i32
    %c0_i32_0 = arith.constant 0 : i32
    return %arg0, %c0_i32 : i32, i32
  }
}

module attributes {stable_mosaic.version = 11 : i64} {
  func.func @_mlp_kernel(%arg0: i32, %arg1: i32, %arg2: memref<16x32xf32, #tpu.memory_space<vmem>>, %arg3: memref<32x64xf32, #tpu.memory_space<vmem>>, %arg4: memref<1x64xf32, #tpu.memory_space<vmem>>, %arg5: memref<64x32xf32, #tpu.memory_space<vmem>>, %arg6: memref<1x32xf32, #tpu.memory_space<vmem>>, %arg7: memref<16x32xf32, #tpu.memory_space<vmem>>, %arg8: memref<16x32xf32, #tpu.memory_space<vmem>>) attributes {dimension_semantics = [#tpu.dimension_semantics<parallel>, #tpu.dimension_semantics<arbitrary>], iteration_bounds = array<i64: 1, 1>, scalar_prefetch = 0 : i64, scratch_operands = 1 : i64, tpu.core_type = #tpu.core_type<tc>, window_params = [{transform_indices = @transform_0, window_bounds = array<i64: 16, 32>}, {transform_indices = @transform_1, window_bounds = array<i64: 32, 64>}, {transform_indices = @transform_2, window_bounds = array<i64: 1, 64>}, {transform_indices = @transform_3, window_bounds = array<i64: 64, 32>}, {pipeline_mode = #tpu.pipeline_mode<synchronous>, transform_indices = @transform_4, window_bounds = array<i64: 1, 32>}, {transform_indices = @transform_5, window_bounds = array<i64: 16, 32>}]} {
    %c0_i32 = arith.constant 0 : i32
    %0 = arith.cmpi eq, %arg1, %c0_i32 : i32
    %1 = arith.extui %0 : i1 to i32
    %c0_i32_0 = arith.constant 0 : i32
    %2 = arith.cmpi ne, %1, %c0_i32_0 : i32
    scf.if %2 {
      %cst_20 = arith.constant 0.000000e+00 : f32
      %31 = vector.broadcast %cst_20 : f32 to vector<16x32xf32>
      %c0_21 = arith.constant 0 : index
      %c0_22 = arith.constant 0 : index
      %32 = vector.load %arg8[%c0_21, %c0_22] : memref<16x32xf32, #tpu.memory_space<vmem>>, vector<16x32xf32>
      tpu.vector_store %arg8[%c0_21, %c0_22], %31 {strides = array<i32>} : memref<16x32xf32, #tpu.memory_space<vmem>>, vector<16x32xf32>,
    } else {
    }
    %c0 = arith.constant 0 : index
    %c0_1 = arith.constant 0 : index
    %3 = vector.load %arg2[%c0, %c0_1] : memref<16x32xf32, #tpu.memory_space<vmem>>, vector<16x32xf32>
    %c0_2 = arith.constant 0 : index
    %c0_3 = arith.constant 0 : index
    %4 = vector.load %arg3[%c0_2, %c0_3] : memref<32x64xf32, #tpu.memory_space<vmem>>, vector<32x64xf32>
    %cst = arith.constant dense<0.000000e+00> : vector<16x64xf32>
    %5 = tpu.matmul %3, %4, %cst {dimension_numbers = #tpu.dot_dimension_numbers<[1], [0], [0], [1], [0, 0, 1, 1], [], []>} : vector<16x32xf32>, vector<32x64xf32>, vector<16x64xf32> -> vector<16x64xf32>
    %c0_4 = arith.constant 0 : index
    %c0_5 = arith.constant 0 : index
    %6 = vector.load %arg4[%c0_4, %c0_5] : memref<1x64xf32, #tpu.memory_space<vmem>>, vector<1x64xf32>
    %7 = vector.broadcast %6 : vector<1x64xf32> to vector<16x64xf32>
    %8 = arith.addf %5, %7 : vector<16x64xf32>
    %9 = arith.mulf %8, %8 : vector<16x64xf32>
    %cst_6 = arith.constant 5.000000e-01 : f32
    %10 = vector.broadcast %cst_6 : f32 to vector<16x64xf32>
    %11 = arith.mulf %10, %8 : vector<16x64xf32>
    %cst_7 = arith.constant 4.471500e-02 : f32
    %12 = vector.broadcast %cst_7 : f32 to vector<16x64xf32>
    %13 = arith.mulf %12, %9 : vector<16x64xf32>
    %cst_8 = arith.constant 1.000000e+00 : f32
    %14 = vector.broadcast %cst_8 : f32 to vector<16x64xf32>
    %15 = arith.addf %14, %13 : vector<16x64xf32>
    %16 = arith.mulf %8, %15 : vector<16x64xf32>
    %cst_9 = arith.constant 0.797884583 : f32
    %17 = vector.broadcast %cst_9 : f32 to vector<16x64xf32>
    %18 = arith.mulf %17, %16 : vector<16x64xf32>
    %19 = math.tanh %18 : vector<16x64xf32>
    %cst_10 = arith.constant 1.000000e+00 : f32
    %20 = vector.broadcast %cst_10 : f32 to vector<16x64xf32>
    %21 = arith.addf %20, %19 : vector<16x64xf32>
    %22 = arith.mulf %11, %21 : vector<16x64xf32>
    %c0_11 = arith.constant 0 : index
    %c0_12 = arith.constant 0 : index
    %23 = vector.load %arg8[%c0_11, %c0_12] : memref<16x32xf32, #tpu.memory_space<vmem>>, vector<16x32xf32>
    %c0_13 = arith.constant 0 : index
    %c0_14 = arith.constant 0 : index
    %24 = vector.load %arg5[%c0_13, %c0_14] : memref<64x32xf32, #tpu.memory_space<vmem>>, vector<64x32xf32>
    %cst_15 = arith.constant dense<0.000000e+00> : vector<16x32xf32>
    %25 = tpu.matmul %22, %24, %cst_15 {dimension_numbers = #tpu.dot_dimension_numbers<[1], [0], [0], [1], [0, 0, 1, 1], [], []>} : vector<16x64xf32>, vector<64x32xf32>, vector<16x32xf32> -> vector<16x32xf32>
    %26 = arith.addf %23, %25 : vector<16x32xf32>
    %c0_16 = arith.constant 0 : index
    %c0_17 = arith.constant 0 : index
    %27 = vector.load %arg8[%c0_16, %c0_17] : memref<16x32xf32, #tpu.memory_space<vmem>>, vector<16x32xf32>
    tpu.vector_store %arg8[%c0_16, %c0_17], %26 {strides = array<i32>} : memref<16x32xf32, #tpu.memory_space<vmem>>, vector<16x32xf32>,
    %c0_i32_18 = arith.constant 0 : i32
    %28 = arith.cmpi eq, %arg1, %c0_i32_18 : i32
    %29 = arith.extui %28 : i1 to i32
    %c0_i32_19 = arith.constant 0 : i32
    %30 = arith.cmpi ne, %29, %c0_i32_19 : i32
    scf.if %30 {
      %c0_20 = arith.constant 0 : index
      %c0_21 = arith.constant 0 : index
      %31 = vector.load %arg8[%c0_20, %c0_21] : memref<16x32xf32, #tpu.memory_space<vmem>>, vector<16x32xf32>
      %c0_22 = arith.constant 0 : index
      %c0_23 = arith.constant 0 : index
      %32 = vector.load %arg6[%c0_22, %c0_23] : memref<1x32xf32, #tpu.memory_space<vmem>>, vector<1x32xf32>
      %33 = vector.broadcast %32 : vector<1x32xf32> to vector<16x32xf32>
      %34 = arith.addf %31, %33 : vector<16x32xf32>
      %c0_24 = arith.constant 0 : index
      %c0_25 = arith.constant 0 : index
      %35 = vector.load %arg7[%c0_24, %c0_25] : memref<16x32xf32, #tpu.memory_space<vmem>>, vector<16x32xf32>
      tpu.vector_store %arg7[%c0_24, %c0_25], %34 {strides = array<i32>} : memref<16x32xf32, #tpu.memory_space<vmem>>, vector<16x32xf32>,
    } else {
    }
    return
  }
  func.func @transform_0(%arg0: i32, %arg1: i32) -> (i32, i32) {
    %c0_i32 = arith.constant 0 : i32
    %c0_i32_0 = arith.constant 0 : i32
    return %arg0, %c0_i32 : i32, i32
  }
  func.func @transform_1(%arg0: i32, %arg1: i32) -> (i32, i32) {
    %c0_i32 = arith.constant 0 : i32
    %c0_i32_0 = arith.constant 0 : i32
    return %c0_i32, %arg1 : i32, i32
  }
  func.func @transform_2(%arg0: i32, %arg1: i32) -> (i32, i32) {
    %c0_i32 = arith.constant 0 : i32
    %c0_i32_0 = arith.constant 0 : i32
    return %c0_i32, %arg1 : i32, i32
  }
  func.func @transform_3(%arg0: i32, %arg1: i32) -> (i32, i32) {
    %c0_i32 = arith.constant 0 : i32
    %c0_i32_0 = arith.constant 0 : i32
    return %arg1, %c0_i32 : i32, i32
  }
  func.func @transform_4(%arg0: i32, %arg1: i32) -> (i32, i32) {
    %c0_i32 = arith.constant 0 : i32
    %c0_i32_0 = arith.constant 0 : i32
    %c0_i32_1 = arith.constant 0 : i32
    return %c0_i32, %c0_i32_0 : i32, i32
  }
  func.func @transform_5(%arg0: i32, %arg1: i32) -> (i32, i32) {
    %c0_i32 = arith.constant 0 : i32
    %c0_i32_0 = arith.constant 0 : i32
    return %arg0, %c0_i32 : i32, i32
  }
}

</mosaic_0001>

<llo_original>
// kernel: tpu_custom_call.1
$region0: #{tpu_custom_call.1}
  #allocation0 [shape = 'u32[]', space=smem, size = 0x4, offset = 0x4, fixed_abs, tag = 'smem constant byte address 0x4 - core index']
  #allocation1 [shape = 'u32[144,128]{1,0:T(1,128)}', space=vmem, size = 0x12000, scoped, tag = 'internal scratch']
  #allocation2 [shape = 'f32[16,32]{1,0:T(8,128)}', space=vmem, size = 0x2000, scoped, tag = 'scratch operand']
  %s0 = inlined_call_operand.vmem [shape: f32[16,32], index: 0, kind: input, shape index: {}]
  %s1 = inlined_call_operand.vmem [shape: f32[32,64], index: 1, kind: input, shape index: {}]
  %s2 = inlined_call_operand.vmem [shape: f32[1,64], index: 2, kind: input, shape index: {}]
  %s3 = inlined_call_operand.vmem [shape: f32[64,32], index: 3, kind: input, shape index: {}]
  %s4 = inlined_call_operand.vmem [shape: f32[1,32], index: 4, kind: input, shape index: {}]
  %s5 = inlined_call_operand.hbm [shape: f32[16,32], index: 5, kind: output, shape index: {}]
  %s6 = sld [smem:[#allocation0]]
  $region38: #{tpu_custom_call.1} parent=0
    _
  %s8 = ssub.s32 1, %s6
  %s9 = scalar_select 0, %s8, %s6
  $region1: #{tpu_custom_call.1} parent=0
    #allocation3 [shape = 'u8[8192]{0}', space=vmem, size = 0x2000, scoped, tag = 'output window, operand 0, single buffered']
    #allocation4 [shape = 's32[1]{0}', space=sflag, size = 0x4, scoped, tag = 'scoped memory for tpu_custom_call.1']
    %10 = vsyncpa [#allocation4], 0
    // Predicated region
    $region2: #{tpu_custom_call.1} parent=1 // pred_check
      _
    $region3: #{tpu_custom_call.1} parent=1 // pred_check_branch
      %12 = sbr.rel (0) target = $region5
    $region4: #{tpu_custom_call.1} parent=1 // pred_region
      _
    $region5: #{tpu_custom_call.1} parent=1 // pred_fallthru
      _
    // Predicated region
    $region6: #{tpu_custom_call.1} parent=1 // pred_check
      _
    $region7: #{tpu_custom_call.1} parent=1 // pred_check_branch
      %14 = sbr.rel (0) target = $region9
    $region8: #{tpu_custom_call.1} parent=1 // pred_region
      _
    $region9: #{tpu_custom_call.1} parent=1 // pred_fallthru
      _
    // Predicated region
    $region10: #{tpu_custom_call.1} parent=1 // pred_check
      _
    $region11: #{tpu_custom_call.1} parent=1 // pred_check_branch
      %16 = sbr.rel (0) target = $region13
    $region12: #{tpu_custom_call.1} parent=1 // pred_region
      _
    $region13: #{tpu_custom_call.1} parent=1 // pred_fallthru
      _
    // Predicated region
    $region14: #{tpu_custom_call.1} parent=1 // pred_check
      _
    $region15: #{tpu_custom_call.1} parent=1 // pred_check_branch
      %18 = sbr.rel (0) target = $region17
    $region16: #{tpu_custom_call.1} parent=1 // pred_region
      _
    $region17: #{tpu_custom_call.1} parent=1 // pred_fallthru
      _
    // Predicated region
    $region18: #{tpu_custom_call.1} parent=1 // pred_check
      _
    $region19: #{tpu_custom_call.1} parent=1 // pred_check_branch
      %20 = sbr.rel (0) target = $region21
    $region20: #{tpu_custom_call.1} parent=1 // pred_region
      _
    $region21: #{tpu_custom_call.1} parent=1 // pred_fallthru
      _
    %p21 = scmp.eq.s32.totalorder 0, 0
    // Predicated region
    $region22: #{tpu_custom_call.1} parent=1 // pred_check
      %p22 = pneg %p21
    $region23: #{tpu_custom_call.1} parent=1 // pred_check_branch
      %24 = sbr.rel (%p22) target = $region25
    $region24: #{tpu_custom_call.1} parent=1 // pred_region
      %vm25 = vcmask 261120
      %26 = vst.msk [vmem:[#allocation2] sm:$0xff] %vm25, 0.0
      %27 = vst.msk [vmem:[#allocation2 + $0x8] sm:$0xff] %vm25, 0.0
    $region25: #{tpu_custom_call.1} parent=1 // pred_fallthru
      _
    %v28 = vld [vmem:[%s0] sm:$0xff]
    %v29 = vld [vmem:[%s0 + $0x8] sm:$0xff]
    %v30 = vld [vmem:[%s1] sm:$0xff]
    %v31 = vld [vmem:[%s1 + $0x8] sm:$0xff]
    %v32 = vld [vmem:[%s1 + $0x10] sm:$0xff]
    %v33 = vld [vmem:[%s1 + $0x18] sm:$0xff]
    %v34 = vld [vmem:[%s2] sm:$0x1]
    %v36 = vlaneseq
    %v37 = vshrl.u32 %v36, 7
    %v38 = vsub.s32 0, %v37
    %v39 = vrot.slane %v34, %v38
    %vm41 = vcmask 261120
    %v43 = vsel %vm41, %v28, 0
    %v46 = vsel %vm41, %v29, 0
    %48 = vmatprep.subr.mxu0 0.0
    %49 = vmatpush1.msra.mxu0 %v30
    %50 = vmatprep.subr.mxu0 0.0
    %51 = vmatpush1.msra.mxu0 %v31
    %52 = vmatprep.subr.mxu0 0.0
    %53 = vmatpush1.msra.mxu0 %v32
    %54 = vmatprep.subr.mxu0 0.0
    %55 = vmatpush1.msra.mxu0 %v33
    %56 = vmatprep.subr.mxu0 0.0
    %57 = vmatpush1.msra.mxu0 0.0
    %58 = vmatprep.subr.mxu0 0.0
    %59 = vmatpush1.msra.mxu0 0.0
    %60 = vmatprep.subr.mxu0 0.0
    %61 = vmatpush1.msra.mxu0 0.0
    %62 = vmatprep.subr.mxu0 0.0
    %63 = vmatpush1.msra.mxu0 0.0
    %64 = vmatprep.subr.mxu0 0.0
    %65 = vmatpush1.msra.mxu0 0.0
    %66 = vmatprep.subr.mxu0 0.0
    %67 = vmatpush1.msra.mxu0 0.0
    %68 = vmatprep.subr.mxu0 0.0
    %69 = vmatpush1.msra.mxu0 0.0
    %70 = vmatprep.subr.mxu0 0.0
    %71 = vmatpush1.msra.mxu0 0.0
    %72 = vmatprep.subr.mxu0 0.0
    %73 = vmatpush1.msra.mxu0 0.0
    %74 = vmatprep.subr.mxu0 0.0
    %75 = vmatpush1.msra.mxu0 0.0
    %76 = vmatprep.subr.mxu0 0.0
    %77 = vmatpush1.msra.mxu0 0.0
    %78 = vmatprep.subr.mxu0 0.0
    %79 = vmatpush1.msra.mxu0 0.0
    %80 = vmatprep.subr.mxu0 0.0
    %81 = vmatpush1.msra.mxu0 0.0
    %82 = vmatprep.subr.mxu0 0.0
    %83 = vmatpush1.msra.mxu0 0.0
    %84 = vmatprep.subr.mxu0 0.0
    %85 = vmatpush1.msra.mxu0 0.0
    %86 = vmatprep.subr.mxu0 0.0
    %87 = vmatpush1.msra.mxu0 0.0
    %88 = vmatprep.subr.mxu0 0.0
    %89 = vmatpush1.msra.mxu0 0.0
    %90 = vmatprep.subr.mxu0 0.0
    %91 = vmatpush1.msra.mxu0 0.0
    %92 = vmatprep.subr.mxu0 0.0
    %93 = vmatpush1.msra.mxu0 0.0
    %94 = vmatprep.subr.mxu0 0.0
    %95 = vmatpush1.msra.mxu0 0.0
    %96 = vmatprep.subr.mxu0 0.0
    %97 = vmatpush1.msra.mxu0 0.0
    %98 = vmatprep.subr.mxu0 0.0
    %99 = vmatpush1.msra.mxu0 0.0
    %100 = vmatprep.subr.mxu0 0.0
    %101 = vmatpush1.msra.mxu0 0.0
    %102 = vmatprep.subr.mxu0 0.0
    %103 = vmatpush1.msra.mxu0 0.0
    %104 = vmatprep.subr.mxu0 0.0
    %105 = vmatpush1.msra.mxu0 0.0
    %106 = vmatprep.subr.mxu0 0.0
    %107 = vmatpush1.msra.mxu0 0.0
    %108 = vmatprep.subr.mxu0 0.0
    %109 = vmatpush1.msra.mxu0 0.0
    %110 = vmatprep.subr.mxu0 0.0
    %111 = vmatpush1.msra.mxu0 0.0
    %112 = vmatprep.mubr.f32.mxu0 0.0
    %113 = vmatmul.mubr.f32.gmra.mrb[0].mxu0 %v43
    %v114 = vpop.f32.mrb[0].mxu0
    %v115 = vadd.f32 %v39, %v114
    %v116 = vpop.f32.mrb[0].mxu0
    %117 = vmatprep.mubr.f32.mxu0 0.0
    %118 = vmatmul.mubr.f32.gmra.mrb[0].mxu0 %v46
    %v119 = vpop.f32.mrb[0].mxu0
    %v120 = vadd.f32 %v39, %v119
    %v121 = vpop.f32.mrb[0].mxu0
    %122 = vdwg.mxu0
    %v123 = vmul.f32 %v115, %v115
    %v124 = vmul.f32 %v120, %v120
    %v125 = vmul.f32 %v115, 0.5
    %v126 = vmul.f32 %v120, 0.5
    %v127 = vmul.f32 %v123, 0.044715
    %v128 = vmul.f32 %v124, 0.044715
    %v129 = vadd.f32 %v127, 1.0
    %v130 = vadd.f32 %v128, 1.0
    %v131 = vmul.f32 %v115, %v129
    %v132 = vmul.f32 %v120, %v130
    %v133 = vmul.f32 %v131, 0.7978846
    %v134 = vmul.f32 %v132, 0.7978846
    %v135 = vtanh.pop %v133
    %v136 = vtanh.pop %v134
    %v137 = vadd.f32 %v135, 1.0
    %v138 = vadd.f32 %v136, 1.0
    %v139 = vmul.f32 %v125, %v137
    %v140 = vmul.f32 %v126, %v138
    %v141 = vld [vmem:[#allocation2] sm:$0xff]
    %v142 = vld [vmem:[#allocation2 + $0x8] sm:$0xff]
    %v143 = vld [vmem:[%s3] sm:$0xff]
    %v144 = vld [vmem:[%s3 + $0x8] sm:$0xff]
    %v145 = vld [vmem:[%s3 + $0x10] sm:$0xff]
    %v146 = vld [vmem:[%s3 + $0x18] sm:$0xff]
    %v147 = vld [vmem:[%s3 + $0x20] sm:$0xff]
    %v148 = vld [vmem:[%s3 + $0x28] sm:$0xff]
    %v149 = vld [vmem:[%s3 + $0x30] sm:$0xff]
    %v150 = vld [vmem:[%s3 + $0x38] sm:$0xff]
    %vm151 = vcmask 523264
    %v153 = vsel %vm151, %v139, 0
    %v156 = vsel %vm151, %v140, 0
    %158 = vmatprep.subr.mxu0 0.0
    %159 = vmatpush1.msra.mxu0 %v143
    %160 = vmatprep.subr.mxu0 0.0
    %161 = vmatpush1.msra.mxu0 %v144
    %162 = vmatprep.subr.mxu0 0.0
    %163 = vmatpush1.msra.mxu0 %v145
    %164 = vmatprep.subr.mxu0 0.0
    %165 = vmatpush1.msra.mxu0 %v146
    %166 = vmatprep.subr.mxu0 0.0
    %167 = vmatpush1.msra.mxu0 %v147
    %168 = vmatprep.subr.mxu0 0.0
    %169 = vmatpush1.msra.mxu0 %v148
    %170 = vmatprep.subr.mxu0 0.0
    %171 = vmatpush1.msra.mxu0 %v149
    %172 = vmatprep.subr.mxu0 0.0
    %173 = vmatpush1.msra.mxu0 %v150
    %174 = vmatprep.subr.mxu0 0.0
    %175 = vmatpush1.msra.mxu0 0.0
    %176 = vmatprep.subr.mxu0 0.0
    %177 = vmatpush1.msra.mxu0 0.0
    %178 = vmatprep.subr.mxu0 0.0
    %179 = vmatpush1.msra.mxu0 0.0
    %180 = vmatprep.subr.mxu0 0.0
    %181 = vmatpush1.msra.mxu0 0.0
    %182 = vmatprep.subr.mxu0 0.0
    %183 = vmatpush1.msra.mxu0 0.0
    %184 = vmatprep.subr.mxu0 0.0
    %185 = vmatpush1.msra.mxu0 0.0
    %186 = vmatprep.subr.mxu0 0.0
    %187 = vmatpush1.msra.mxu0 0.0
    %188 = vmatprep.subr.mxu0 0.0
    %189 = vmatpush1.msra.mxu0 0.0
    %190 = vmatprep.subr.mxu0 0.0
    %191 = vmatpush1.msra.mxu0 0.0
    %192 = vmatprep.subr.mxu0 0.0
    %193 = vmatpush1.msra.mxu0 0.0
    %194 = vmatprep.subr.mxu0 0.0
    %195 = vmatpush1.msra.mxu0 0.0
    %196 = vmatprep.subr.mxu0 0.0
    %197 = vmatpush1.msra.mxu0 0.0
    %198 = vmatprep.subr.mxu0 0.0
    %199 = vmatpush1.msra.mxu0 0.0
    %200 = vmatprep.subr.mxu0 0.0
    %201 = vmatpush1.msra.mxu0 0.0
    %202 = vmatprep.subr.mxu0 0.0
    %203 = vmatpush1.msra.mxu0 0.0
    %204 = vmatprep.subr.mxu0 0.0
    %205 = vmatpush1.msra.mxu0 0.0
    %206 = vmatprep.subr.mxu0 0.0
    %207 = vmatpush1.msra.mxu0 0.0
    %208 = vmatprep.subr.mxu0 0.0
    %209 = vmatpush1.msra.mxu0 0.0
    %210 = vmatprep.subr.mxu0 0.0
    %211 = vmatpush1.msra.mxu0 0.0
    %212 = vmatprep.subr.mxu0 0.0
    %213 = vmatpush1.msra.mxu0 0.0
    %214 = vmatprep.subr.mxu0 0.0
    %215 = vmatpush1.msra.mxu0 0.0
    %216 = vmatprep.subr.mxu0 0.0
    %217 = vmatpush1.msra.mxu0 0.0
    %218 = vmatprep.subr.mxu0 0.0
    %219 = vmatpush1.msra.mxu0 0.0
    %220 = vmatprep.subr.mxu0 0.0
    %221 = vmatpush1.msra.mxu0 0.0
    %222 = vmatprep.mubr.f32.mxu0 0.0
    %223 = vmatmul.mubr.f32.gmra.mrb[0].mxu0 %v153
    %v224 = vpop.f32.mrb[0].mxu0
    %v225 = vadd.f32 0.0, %v224
    %v226 = vpop.f32.mrb[0].mxu0
    %227 = vmatprep.mubr.f32.mxu0 0.0
    %228 = vmatmul.mubr.f32.gmra.mrb[0].mxu0 %v156
    %v229 = vpop.f32.mrb[0].mxu0
    %v230 = vadd.f32 0.0, %v229
    %v231 = vpop.f32.mrb[0].mxu0
    %232 = vdwg.mxu0
    %v233 = vadd.f32 %v141, %v225
    %v234 = vadd.f32 %v142, %v230
    %235 = vst.msk [vmem:[#allocation2] sm:$0xff] %vm41, %v233
    %236 = vst.msk [vmem:[#allocation2 + $0x8] sm:$0xff] %vm41, %v234
    // Predicated region
    $region26: #{tpu_custom_call.1} parent=1 // pred_check
      %p237 = pneg %p21
    $region27: #{tpu_custom_call.1} parent=1 // pred_check_branch
      %239 = sbr.rel (%p237) target = $region29
    $region28: #{tpu_custom_call.1} parent=1 // pred_region
      %v240 = vld [vmem:[#allocation2] sm:$0xff]
      %v241 = vld [vmem:[#allocation2 + $0x8] sm:$0xff]
      %v242 = vld [vmem:[%s4] sm:$0x1]
      %v244 = vlaneseq
      %v245 = vshrl.u32 %v244, 7
      %v246 = vsub.s32 0, %v245
      %v247 = vrot.slane %v242, %v246
      %v249 = vadd.f32 %v240, %v247
      %v250 = vadd.f32 %v241, %v247
      %251 = vst.msk [vmem:[#allocation3] sm:$0xff] %vm41, %v249
      %252 = vst.msk [vmem:[#allocation3 + $0x8] sm:$0xff] %vm41, %v250
    $region29: #{tpu_custom_call.1} parent=1 // pred_fallthru
      _
    // Predicated region
    $region30: #{tpu_custom_call.1} parent=1 // pred_check
      _
    $region31: #{tpu_custom_call.1} parent=1 // pred_check_branch
      %254 = sbr.rel (0) target = $region33
    $region32: #{tpu_custom_call.1} parent=1 // pred_region
      %s256 = ssub.s32 256, 256
      %257 = vsyncadd [#allocation4], %s256
      %s258 = sshll.u32 [#allocation3], 4
      %s259 = int_to_ptr.vmem [resolvable:$true] %s258
      %264 = dma.vmem_to_hbm [thread:$0]  %s259, 256, %s5, [#allocation4], 128, 128, 8
    $region33: #{tpu_custom_call.1} parent=1 // pred_fallthru
      _
    // Predicated region
    $region34: #{tpu_custom_call.1} parent=1 // pred_check
      _
    $region35: #{tpu_custom_call.1} parent=1 // pred_check_branch
      %266 = sbr.rel (0) target = $region37
    $region36: #{tpu_custom_call.1} parent=1 // pred_region
      %267 = dma.done [#allocation4], 256
    $region37: #{tpu_custom_call.1} parent=1 // pred_fallthru
      _
    %268 = vsyncpa [#allocation4], 1

// kernel: tpu_custom_call.1
$region0: #{tpu_custom_call.1}
  #allocation0 [shape = 'u32[]', space=smem, size = 0x4, offset = 0x4, fixed_abs, tag = 'smem constant byte address 0x4 - core index']
  #allocation1 [shape = 'u32[144,128]{1,0:T(1,128)}', space=vmem, size = 0x12000, scoped, tag = 'internal scratch']
  #allocation2 [shape = 'f32[16,32]{1,0:T(8,128)}', space=vmem, size = 0x2000, scoped, tag = 'scratch operand']
  %s0 = inlined_call_operand.vmem [shape: f32[16,32], index: 0, kind: input, shape index: {}]
  %s1 = inlined_call_operand.vmem [shape: f32[32,64], index: 1, kind: input, shape index: {}]
  %s2 = inlined_call_operand.vmem [shape: f32[1,64], index: 2, kind: input, shape index: {}]
  %s3 = inlined_call_operand.vmem [shape: f32[64,32], index: 3, kind: input, shape index: {}]
  %s4 = inlined_call_operand.vmem [shape: f32[1,32], index: 4, kind: input, shape index: {}]
  %s5 = inlined_call_operand.hbm [shape: f32[16,32], index: 5, kind: output, shape index: {}]
  %s6 = sld [smem:[#allocation0]]
  $region38: #{tpu_custom_call.1} parent=0
    _
  %s8 = ssub.s32 1, %s6
  %s9 = scalar_select 0, %s8, %s6
  $region1: #{tpu_custom_call.1} parent=0
    #allocation3 [shape = 'u8[8192]{0}', space=vmem, size = 0x2000, scoped, tag = 'output window, operand 0, single buffered']
    #allocation4 [shape = 's32[1]{0}', space=sflag, size = 0x4, scoped, tag = 'scoped memory for tpu_custom_call.1']
    %10 = vsyncpa [#allocation4], 0
    // Predicated region
    $region2: #{tpu_custom_call.1} parent=1 // pred_check
      _
    $region3: #{tpu_custom_call.1} parent=1 // pred_check_branch
      %12 = sbr.rel (0) target = $region5
    $region4: #{tpu_custom_call.1} parent=1 // pred_region
      _
    $region5: #{tpu_custom_call.1} parent=1 // pred_fallthru
      _
    // Predicated region
    $region6: #{tpu_custom_call.1} parent=1 // pred_check
      _
    $region7: #{tpu_custom_call.1} parent=1 // pred_check_branch
      %14 = sbr.rel (0) target = $region9
    $region8: #{tpu_custom_call.1} parent=1 // pred_region
      _
    $region9: #{tpu_custom_call.1} parent=1 // pred_fallthru
      _
    // Predicated region
    $region10: #{tpu_custom_call.1} parent=1 // pred_check
      _
    $region11: #{tpu_custom_call.1} parent=1 // pred_check_branch
      %16 = sbr.rel (0) target = $region13
    $region12: #{tpu_custom_call.1} parent=1 // pred_region
      _
    $region13: #{tpu_custom_call.1} parent=1 // pred_fallthru
      _
    // Predicated region
    $region14: #{tpu_custom_call.1} parent=1 // pred_check
      _
    $region15: #{tpu_custom_call.1} parent=1 // pred_check_branch
      %18 = sbr.rel (0) target = $region17
    $region16: #{tpu_custom_call.1} parent=1 // pred_region
      _
    $region17: #{tpu_custom_call.1} parent=1 // pred_fallthru
      _
    // Predicated region
    $region18: #{tpu_custom_call.1} parent=1 // pred_check
      _
    $region19: #{tpu_custom_call.1} parent=1 // pred_check_branch
      %20 = sbr.rel (0) target = $region21
    $region20: #{tpu_custom_call.1} parent=1 // pred_region
      _
    $region21: #{tpu_custom_call.1} parent=1 // pred_fallthru
      _
    %p21 = scmp.eq.s32.totalorder 0, 0
    // Predicated region
    $region22: #{tpu_custom_call.1} parent=1 // pred_check
      %p22 = pneg %p21
    $region23: #{tpu_custom_call.1} parent=1 // pred_check_branch
      %24 = sbr.rel (%p22) target = $region25
    $region24: #{tpu_custom_call.1} parent=1 // pred_region
      %vm25 = vcmask 261120
      %26 = vst.msk [vmem:[#allocation2] sm:$0xff] %vm25, 0.0
      %27 = vst.msk [vmem:[#allocation2 + $0x8] sm:$0xff] %vm25, 0.0
    $region25: #{tpu_custom_call.1} parent=1 // pred_fallthru
      _
    %v28 = vld [vmem:[%s0] sm:$0xff]
    %v29 = vld [vmem:[%s0 + $0x8] sm:$0xff]
    %v30 = vld [vmem:[%s1] sm:$0xff]
    %v31 = vld [vmem:[%s1 + $0x8] sm:$0xff]
    %v32 = vld [vmem:[%s1 + $0x10] sm:$0xff]
    %v33 = vld [vmem:[%s1 + $0x18] sm:$0xff]
    %v34 = vld [vmem:[%s2] sm:$0x1]
    %v36 = vlaneseq
    %v37 = vshrl.u32 %v36, 7
    %v38 = vsub.s32 0, %v37
    %v39 = vrot.slane %v34, %v38
    %vm41 = vcmask 261120
    %v43 = vsel %vm41, %v28, 0
    %v46 = vsel %vm41, %v29, 0
    %48 = vmatprep.subr.mxu0 0.0
    %49 = vmatpush1.msra.mxu0 %v30
    %50 = vmatprep.subr.mxu0 0.0
    %51 = vmatpush1.msra.mxu0 %v31
    %52 = vmatprep.subr.mxu0 0.0
    %53 = vmatpush1.msra.mxu0 %v32
    %54 = vmatprep.subr.mxu0 0.0
    %55 = vmatpush1.msra.mxu0 %v33
    %56 = vmatprep.subr.mxu0 0.0
    %57 = vmatpush1.msra.mxu0 0.0
    %58 = vmatprep.subr.mxu0 0.0
    %59 = vmatpush1.msra.mxu0 0.0
    %60 = vmatprep.subr.mxu0 0.0
    %61 = vmatpush1.msra.mxu0 0.0
    %62 = vmatprep.subr.mxu0 0.0
    %63 = vmatpush1.msra.mxu0 0.0
    %64 = vmatprep.subr.mxu0 0.0
    %65 = vmatpush1.msra.mxu0 0.0
    %66 = vmatprep.subr.mxu0 0.0
    %67 = vmatpush1.msra.mxu0 0.0
    %68 = vmatprep.subr.mxu0 0.0
    %69 = vmatpush1.msra.mxu0 0.0
    %70 = vmatprep.subr.mxu0 0.0
    %71 = vmatpush1.msra.mxu0 0.0
    %72 = vmatprep.subr.mxu0 0.0
    %73 = vmatpush1.msra.mxu0 0.0
    %74 = vmatprep.subr.mxu0 0.0
    %75 = vmatpush1.msra.mxu0 0.0
    %76 = vmatprep.subr.mxu0 0.0
    %77 = vmatpush1.msra.mxu0 0.0
    %78 = vmatprep.subr.mxu0 0.0
    %79 = vmatpush1.msra.mxu0 0.0
    %80 = vmatprep.subr.mxu0 0.0
    %81 = vmatpush1.msra.mxu0 0.0
    %82 = vmatprep.subr.mxu0 0.0
    %83 = vmatpush1.msra.mxu0 0.0
    %84 = vmatprep.subr.mxu0 0.0
    %85 = vmatpush1.msra.mxu0 0.0
    %86 = vmatprep.subr.mxu0 0.0
    %87 = vmatpush1.msra.mxu0 0.0
    %88 = vmatprep.subr.mxu0 0.0
    %89 = vmatpush1.msra.mxu0 0.0
    %90 = vmatprep.subr.mxu0 0.0
    %91 = vmatpush1.msra.mxu0 0.0
    %92 = vmatprep.subr.mxu0 0.0
    %93 = vmatpush1.msra.mxu0 0.0
    %94 = vmatprep.subr.mxu0 0.0
    %95 = vmatpush1.msra.mxu0 0.0
    %96 = vmatprep.subr.mxu0 0.0
    %97 = vmatpush1.msra.mxu0 0.0
    %98 = vmatprep.subr.mxu0 0.0
    %99 = vmatpush1.msra.mxu0 0.0
    %100 = vmatprep.subr.mxu0 0.0
    %101 = vmatpush1.msra.mxu0 0.0
    %102 = vmatprep.subr.mxu0 0.0
    %103 = vmatpush1.msra.mxu0 0.0
    %104 = vmatprep.subr.mxu0 0.0
    %105 = vmatpush1.msra.mxu0 0.0
    %106 = vmatprep.subr.mxu0 0.0
    %107 = vmatpush1.msra.mxu0 0.0
    %108 = vmatprep.subr.mxu0 0.0
    %109 = vmatpush1.msra.mxu0 0.0
    %110 = vmatprep.subr.mxu0 0.0
    %111 = vmatpush1.msra.mxu0 0.0
    %112 = vmatprep.mubr.f32.mxu0 0.0
    %113 = vmatmul.mubr.f32.gmra.mrb[0].mxu0 %v43
    %v114 = vpop.f32.mrb[0].mxu0
    %v115 = vadd.f32 %v39, %v114
    %v116 = vpop.f32.mrb[0].mxu0
    %117 = vmatprep.mubr.f32.mxu0 0.0
    %118 = vmatmul.mubr.f32.gmra.mrb[0].mxu0 %v46
    %v119 = vpop.f32.mrb[0].mxu0
    %v120 = vadd.f32 %v39, %v119
    %v121 = vpop.f32.mrb[0].mxu0
    %122 = vdwg.mxu0
    %v123 = vmul.f32 %v115, %v115
    %v124 = vmul.f32 %v120, %v120
    %v125 = vmul.f32 %v115, 0.5
    %v126 = vmul.f32 %v120, 0.5
    %v127 = vmul.f32 %v123, 0.044715
    %v128 = vmul.f32 %v124, 0.044715
    %v129 = vadd.f32 %v127, 1.0
    %v130 = vadd.f32 %v128, 1.0
    %v131 = vmul.f32 %v115, %v129
    %v132 = vmul.f32 %v120, %v130
    %v133 = vmul.f32 %v131, 0.7978846
    %v134 = vmul.f32 %v132, 0.7978846
    %v135 = vtanh.pop %v133
    %v136 = vtanh.pop %v134
    %v137 = vadd.f32 %v135, 1.0
    %v138 = vadd.f32 %v136, 1.0
    %v139 = vmul.f32 %v125, %v137
    %v140 = vmul.f32 %v126, %v138
    %v141 = vld [vmem:[#allocation2] sm:$0xff]
    %v142 = vld [vmem:[#allocation2 + $0x8] sm:$0xff]
    %v143 = vld [vmem:[%s3] sm:$0xff]
    %v144 = vld [vmem:[%s3 + $0x8] sm:$0xff]
    %v145 = vld [vmem:[%s3 + $0x10] sm:$0xff]
    %v146 = vld [vmem:[%s3 + $0x18] sm:$0xff]
    %v147 = vld [vmem:[%s3 + $0x20] sm:$0xff]
    %v148 = vld [vmem:[%s3 + $0x28] sm:$0xff]
    %v149 = vld [vmem:[%s3 + $0x30] sm:$0xff]
    %v150 = vld [vmem:[%s3 + $0x38] sm:$0xff]
    %vm151 = vcmask 523264
    %v153 = vsel %vm151, %v139, 0
    %v156 = vsel %vm151, %v140, 0
    %158 = vmatprep.subr.mxu0 0.0
    %159 = vmatpush1.msra.mxu0 %v143
    %160 = vmatprep.subr.mxu0 0.0
    %161 = vmatpush1.msra.mxu0 %v144
    %162 = vmatprep.subr.mxu0 0.0
    %163 = vmatpush1.msra.mxu0 %v145
    %164 = vmatprep.subr.mxu0 0.0
    %165 = vmatpush1.msra.mxu0 %v146
    %166 = vmatprep.subr.mxu0 0.0
    %167 = vmatpush1.msra.mxu0 %v147
    %168 = vmatprep.subr.mxu0 0.0
    %169 = vmatpush1.msra.mxu0 %v148
    %170 = vmatprep.subr.mxu0 0.0
    %171 = vmatpush1.msra.mxu0 %v149
    %172 = vmatprep.subr.mxu0 0.0
    %173 = vmatpush1.msra.mxu0 %v150
    %174 = vmatprep.subr.mxu0 0.0
    %175 = vmatpush1.msra.mxu0 0.0
    %176 = vmatprep.subr.mxu0 0.0
    %177 = vmatpush1.msra.mxu0 0.0
    %178 = vmatprep.subr.mxu0 0.0
    %179 = vmatpush1.msra.mxu0 0.0
    %180 = vmatprep.subr.mxu0 0.0
    %181 = vmatpush1.msra.mxu0 0.0
    %182 = vmatprep.subr.mxu0 0.0
    %183 = vmatpush1.msra.mxu0 0.0
    %184 = vmatprep.subr.mxu0 0.0
    %185 = vmatpush1.msra.mxu0 0.0
    %186 = vmatprep.subr.mxu0 0.0
    %187 = vmatpush1.msra.mxu0 0.0
    %188 = vmatprep.subr.mxu0 0.0
    %189 = vmatpush1.msra.mxu0 0.0
    %190 = vmatprep.subr.mxu0 0.0
    %191 = vmatpush1.msra.mxu0 0.0
    %192 = vmatprep.subr.mxu0 0.0
    %193 = vmatpush1.msra.mxu0 0.0
    %194 = vmatprep.subr.mxu0 0.0
    %195 = vmatpush1.msra.mxu0 0.0
    %196 = vmatprep.subr.mxu0 0.0
    %197 = vmatpush1.msra.mxu0 0.0
    %198 = vmatprep.subr.mxu0 0.0
    %199 = vmatpush1.msra.mxu0 0.0
    %200 = vmatprep.subr.mxu0 0.0
    %201 = vmatpush1.msra.mxu0 0.0
    %202 = vmatprep.subr.mxu0 0.0
    %203 = vmatpush1.msra.mxu0 0.0
    %204 = vmatprep.subr.mxu0 0.0
    %205 = vmatpush1.msra.mxu0 0.0
    %206 = vmatprep.subr.mxu0 0.0
    %207 = vmatpush1.msra.mxu0 0.0
    %208 = vmatprep.subr.mxu0 0.0
    %209 = vmatpush1.msra.mxu0 0.0
    %210 = vmatprep.subr.mxu0 0.0
    %211 = vmatpush1.msra.mxu0 0.0
    %212 = vmatprep.subr.mxu0 0.0
    %213 = vmatpush1.msra.mxu0 0.0
    %214 = vmatprep.subr.mxu0 0.0
    %215 = vmatpush1.msra.mxu0 0.0
    %216 = vmatprep.subr.mxu0 0.0
    %217 = vmatpush1.msra.mxu0 0.0
    %218 = vmatprep.subr.mxu0 0.0
    %219 = vmatpush1.msra.mxu0 0.0
    %220 = vmatprep.subr.mxu0 0.0
    %221 = vmatpush1.msra.mxu0 0.0
    %222 = vmatprep.mubr.f32.mxu0 0.0
    %223 = vmatmul.mubr.f32.gmra.mrb[0].mxu0 %v153
    %v224 = vpop.f32.mrb[0].mxu0
    %v225 = vadd.f32 0.0, %v224
    %v226 = vpop.f32.mrb[0].mxu0
    %227 = vmatprep.mubr.f32.mxu0 0.0
    %228 = vmatmul.mubr.f32.gmra.mrb[0].mxu0 %v156
    %v229 = vpop.f32.mrb[0].mxu0
    %v230 = vadd.f32 0.0, %v229
    %v231 = vpop.f32.mrb[0].mxu0
    %232 = vdwg.mxu0
    %v233 = vadd.f32 %v141, %v225
    %v234 = vadd.f32 %v142, %v230
    %235 = vst.msk [vmem:[#allocation2] sm:$0xff] %vm41, %v233
    %236 = vst.msk [vmem:[#allocation2 + $0x8] sm:$0xff] %vm41, %v234
    // Predicated region
    $region26: #{tpu_custom_call.1} parent=1 // pred_check
      %p237 = pneg %p21
    $region27: #{tpu_custom_call.1} parent=1 // pred_check_branch
      %239 = sbr.rel (%p237) target = $region29
    $region28: #{tpu_custom_call.1} parent=1 // pred_region
      %v240 = vld [vmem:[#allocation2] sm:$0xff]
      %v241 = vld [vmem:[#allocation2 + $0x8] sm:$0xff]
      %v242 = vld [vmem:[%s4] sm:$0x1]
      %v244 = vlaneseq
      %v245 = vshrl.u32 %v244, 7
      %v246 = vsub.s32 0, %v245
      %v247 = vrot.slane %v242, %v246
      %v249 = vadd.f32 %v240, %v247
      %v250 = vadd.f32 %v241, %v247
      %251 = vst.msk [vmem:[#allocation3] sm:$0xff] %vm41, %v249
      %252 = vst.msk [vmem:[#allocation3 + $0x8] sm:$0xff] %vm41, %v250
    $region29: #{tpu_custom_call.1} parent=1 // pred_fallthru
      _
    // Predicated region
    $region30: #{tpu_custom_call.1} parent=1 // pred_check
      _
    $region31: #{tpu_custom_call.1} parent=1 // pred_check_branch
      %254 = sbr.rel (0) target = $region33
    $region32: #{tpu_custom_call.1} parent=1 // pred_region
      %s256 = ssub.s32 256, 256
      %257 = vsyncadd [#allocation4], %s256
      %s258 = sshll.u32 [#allocation3], 4
      %s259 = int_to_ptr.vmem [resolvable:$true] %s258
      %264 = dma.vmem_to_hbm [thread:$0]  %s259, 256, %s5, [#allocation4], 128, 128, 8
    $region33: #{tpu_custom_call.1} parent=1 // pred_fallthru
      _
    // Predicated region
    $region34: #{tpu_custom_call.1} parent=1 // pred_check
      _
    $region35: #{tpu_custom_call.1} parent=1 // pred_check_branch
      %266 = sbr.rel (0) target = $region37
    $region36: #{tpu_custom_call.1} parent=1 // pred_region
      %267 = dma.done [#allocation4], 256
    $region37: #{tpu_custom_call.1} parent=1 // pred_fallthru
      _
    %268 = vsyncpa [#allocation4], 1

</llo_original>
